<compile_context>
chip_gen: v7x
topology: tpu7x:2x2x1
jax: 0.10.0
libtpu: 0.0.40
codegen_flags: <defaults>
</compile_context>

<pallas_src>
import functools

import jax
import jax.numpy as jnp
from jax.experimental import pallas as pl
from jax.experimental.pallas import tpu as pltpu


def _flash_body(q_ref, k_ref, v_ref, mask_ref, o_ref,
                qs_sc, m_sc, l_sc, acc_sc, *,
                scale, kv_len, kv_tile, kv_tail, mxu_dtype, bf16_softmax,
                exact_recip):
    ki = pl.program_id(2)

    @pl.when(ki == 0)
    def _():
        # Hoisted out of the kv loop: 1/sqrt(d_k) folded into q exactly once
        # per (batch, q-tile); the scaled tile lives in VMEM scratch.
        qs_sc[...] = (q_ref[0] * scale).astype(qs_sc.dtype)
        m_sc[...] = jnp.full_like(m_sc, -jnp.inf)
        l_sc[...] = jnp.zeros_like(l_sc)
        acc_sc[...] = jnp.zeros_like(acc_sc)

    q = qs_sc[...]                                  # (tq, d), compute dtype
    k = k_ref[0]                                    # (tk, d)
    if mxu_dtype is not None and k.dtype != mxu_dtype:
        k = k.astype(mxu_dtype)

    # scores = q @ k^T, contracting the last dims directly (no K transpose).
    s = jax.lax.dot_general(
        q, k, dimension_numbers=(((1,), (1,)), ((), ())),
        preferred_element_type=jnp.float32)         # (tq, tk) f32

    if mask_ref is not None:
        # Compare the int8 tile directly (no int32 unpack); nonzero == masked.
        s = jnp.where(mask_ref[0] != 0, jnp.float32(-1e9), s)

    if kv_tail:
        # Keys beyond the true Lk exist only because of block padding; knock
        # them out harder than user-masked keys (-1e30 vs -1e9) so a row whose
        # real keys are all user-masked still matches the module semantics
        # (uniform over the real keys, never over padding).
        col = ki * kv_tile + jax.lax.broadcasted_iota(jnp.int32, s.shape, 1)
        s = jnp.where(col >= kv_len, jnp.float32(-1e30), s)

    # Online softmax (flash attention) update.
    m_prev = m_sc[...]                                           # (tq, 1)
    m_new = jnp.maximum(m_prev, jnp.max(s, axis=-1, keepdims=True))
    alpha = jnp.exp(m_prev - m_new)                              # (tq, 1)
    if bf16_softmax:
        # v6e/v7x only: bf16 exp chain packs 2 elems/lane; m/l/acc stay f32.
        p = jnp.exp((s - m_new).astype(jnp.bfloat16))
    else:
        p = jnp.exp(s - m_new)                                   # (tq, tk)
    l_sc[...] = alpha * l_sc[...] + jnp.sum(
        p, axis=-1, keepdims=True, dtype=jnp.float32)
    pv_dtype = mxu_dtype if mxu_dtype is not None else v_ref.dtype
    acc_sc[...] = alpha * acc_sc[...] + jnp.dot(
        p.astype(pv_dtype), v_ref[0].astype(pv_dtype),
        preferred_element_type=jnp.float32)                      # (tq, dv) f32
    m_sc[...] = m_new

    @pl.when(ki == pl.num_programs(2) - 1)
    def _():
        if exact_recip:
            inv_l = 1.0 / l_sc[...]          # exact (tq,1) divide, negligible
        else:
            inv_l = pl.reciprocal(l_sc[...], approx=True)        # EUP vrcp
        o_ref[0] = (acc_sc[...] * inv_l).astype(o_ref.dtype)


def _flash_kernel(*refs, has_mask, **kwargs):
    if has_mask:
        q_ref, k_ref, v_ref, mask_ref, o_ref, qs_sc, m_sc, l_sc, acc_sc = refs
    else:
        q_ref, k_ref, v_ref, o_ref, qs_sc, m_sc, l_sc, acc_sc = refs
        mask_ref = None
    _flash_body(q_ref, k_ref, v_ref, mask_ref, o_ref,
                qs_sc, m_sc, l_sc, acc_sc, **kwargs)


def self_attention(q, k, v, att_mask=None, *, block_q=512, block_k=512,
                   mxu_bf16=False, bf16_softmax=False):
    """Flash self-attention matching the PyTorch module's eval forward.

    q: [bz, Lq, D], k: [bz, Lk, D], v: [bz, Lk, Dv],
    att_mask: [bz, Lq, Lk] bool/int (nonzero == masked) or None.

    block_q/block_k: sequence tile sizes (multiples of 128).
      * v6e: block_q=512..1024, block_k=512
      * v7x: block_q=384..512,  block_k=512 (64 MiB per-TC VMEM)
      * v5e: block_q=256,       block_k=128 (keeps AI >= the v5e ridge with a
        128 KB (tq,tk) f32 score temp)
    Sequence lengths that are not tile multiples are padded (padded keys are
    masked in-kernel, padded query rows sliced off).

    mxu_bf16:    opt-in f32->bf16 operand cast for the two matmuls (f32 acc).
    bf16_softmax: opt-in bf16 exp chain (v6e/v7x only; keep off on v5e and
                  when strict f32 parity is required).
    """
    bz, lq, d = q.shape
    _, lk, _ = k.shape
    _, _, dv = v.shape
    scale = 1.0 / float(d) ** 0.5

    # --- tile sizes ---------------------------------------------------------
    tq = lq if lq <= block_q else block_q
    tk = lk if lk <= block_k else block_k
    # v7x megacore: keep >= 2 independent (batch, q-tile) grid points when it
    # costs nothing, so both TensorCores get work.
    if bz * pl.cdiv(lq, tq) < 2:
        half = tq // 2
        if half >= 128 and half % 128 == 0 and lq % half == 0:
            tq = half

    lq_pad = tq * pl.cdiv(lq, tq)
    lk_pad = tk * pl.cdiv(lk, tk)
    kv_tail = lk_pad != lk

    # Pad ragged sequence lengths to a tile multiple instead of falling back
    # to a full-extent (non-flash) tile.
    if lq_pad != lq:
        q = jnp.pad(q, ((0, 0), (0, lq_pad - lq), (0, 0)))
    if lk_pad != lk:
        k = jnp.pad(k, ((0, 0), (0, lk_pad - lk), (0, 0)))
        v = jnp.pad(v, ((0, 0), (0, lk_pad - lk), (0, 0)))

    grid = (bz, lq_pad // tq, lk_pad // tk)

    q_spec = pl.BlockSpec((1, tq, d), lambda b, qi, ki: (b, qi, 0))
    k_spec = pl.BlockSpec((1, tk, d), lambda b, qi, ki: (b, ki, 0))
    v_spec = pl.BlockSpec((1, tk, dv), lambda b, qi, ki: (b, ki, 0))
    # Output block is revisited across the (arbitrary) kv axis; only the last
    # kv step writes it (the running accumulator lives in VMEM scratch).
    o_spec = pl.BlockSpec((1, tq, dv), lambda b, qi, ki: (b, qi, 0))

    mxu_dtype = jnp.bfloat16 if (mxu_bf16 and q.dtype == jnp.float32) else None
    qs_dtype = mxu_dtype if mxu_dtype is not None else q.dtype
    exact_recip = jnp.dtype(q.dtype) == jnp.dtype(jnp.float32)

    scratch_shapes = [
        pltpu.VMEM((tq, d), qs_dtype),       # scaled q (hoisted out of kv loop)
        pltpu.VMEM((tq, 1), jnp.float32),    # running max
        pltpu.VMEM((tq, 1), jnp.float32),    # running sum
        pltpu.VMEM((tq, dv), jnp.float32),   # f32 output accumulator
    ]

    kernel = functools.partial(
        _flash_kernel, has_mask=att_mask is not None, scale=scale,
        kv_len=lk, kv_tile=tk, kv_tail=kv_tail, mxu_dtype=mxu_dtype,
        bf16_softmax=bf16_softmax, exact_recip=exact_recip)

    if att_mask is None:
        # No-mask variant: no mask DMA, no where().
        in_specs = [q_spec, k_spec, v_spec]
        operands = (q, k, v)
    else:
        # int8 mask: 4x less HBM traffic than an int32 mask; compared as int8
        # in-kernel (no unpack).
        mask = att_mask.astype(jnp.int8)
        if lq_pad != lq or lk_pad != lk:
            mask = jnp.pad(mask, ((0, 0), (0, lq_pad - lq), (0, lk_pad - lk)))
        m_spec = pl.BlockSpec((1, tq, tk), lambda b, qi, ki: (b, qi, ki))
        in_specs = [q_spec, k_spec, v_spec, m_spec]
        operands = (q, k, v, mask)

    out = pl.pallas_call(
        kernel,
        out_shape=jax.ShapeDtypeStruct((bz, lq_pad, dv), q.dtype),
        grid_spec=pltpu.PrefetchScalarGridSpec(
            num_scalar_prefetch=0,
            grid=grid,
            in_specs=in_specs,
            out_specs=o_spec,
            scratch_shapes=scratch_shapes,
        ),
        compiler_params=pltpu.CompilerParams(
            dimension_semantics=("parallel", "parallel", "arbitrary"),
            # Above the default scoped limits (16/32 MiB), under v7x's 64 MiB
            # physical per-TC VMEM; 512x512 double-buffered tiles fit easily.
            vmem_limit_bytes=48 * 1024 * 1024,
        ),
    )(*operands)

    if lq_pad != lq:
        out = out[:, :lq]
    return out


def _reference(q, k, v, att_mask, scale):
    s = jnp.einsum("bqd,bkd->bqk", q, k) * scale
    if att_mask is not None:
        s = jnp.where(att_mask, -1e9, s)
    p = jax.nn.softmax(s, axis=-1)
    return jnp.einsum("bqk,bkd->bqd", p, v)


if __name__ == "__main__":
    key = jax.random.PRNGKey(0)
    kq, kk, kv = jax.random.split(key, 3)

    # --- Test 1: small shapes matching the module spec (f32) ----------------
    bz, lq, lk, d, dv = 2, 8, 8, 32, 32
    q = jax.random.normal(kq, (bz, lq, d), dtype=jnp.float32)
    k = jax.random.normal(kk, (bz, lk, d), dtype=jnp.float32)
    v = jax.random.normal(kv, (bz, lk, dv), dtype=jnp.float32)
    # Deterministic padding-style mask: mask out last 2 keys of batch 1.
    att_mask = jnp.zeros((bz, lq, lk), dtype=jnp.bool_).at[1, :, -2:].set(True)
    scale = 1.0 / d ** 0.5

    out_m = jax.block_until_ready(self_attention(q, k, v, att_mask))
    ref_m = _reference(q, k, v, att_mask, scale)
    assert out_m.shape == (bz, lq, dv)
    assert jnp.allclose(out_m, ref_m, atol=1e-4, rtol=1e-4)

    out_n = jax.block_until_ready(self_attention(q, k, v, None))
    ref_n = _reference(q, k, v, None, scale)
    assert jnp.allclose(out_n, ref_n, atol=1e-4, rtol=1e-4)

    # --- Test 2: bf16, multi-tile flash path (exercises online softmax) -----
    bz2, l2, d2 = 2, 256, 128
    kq2, kk2, kv2 = jax.random.split(jax.random.PRNGKey(1), 3)
    q2 = jax.random.normal(kq2, (bz2, l2, d2), dtype=jnp.bfloat16)
    k2 = jax.random.normal(kk2, (bz2, l2, d2), dtype=jnp.bfloat16)
    v2 = jax.random.normal(kv2, (bz2, l2, d2), dtype=jnp.bfloat16)
    mask2 = jnp.zeros((bz2, l2, l2), dtype=jnp.bool_).at[1, :, -64:].set(True)
    out2 = jax.block_until_ready(
        self_attention(q2, k2, v2, mask2, block_q=128, block_k=128))
    ref2 = _reference(q2.astype(jnp.float32), k2.astype(jnp.float32),
                      v2.astype(jnp.float32), mask2, 1.0 / d2 ** 0.5)
    assert out2.shape == (bz2, l2, d2)
    assert jnp.allclose(out2.astype(jnp.float32), ref2, atol=2e-2, rtol=2e-2)

    # --- Test 3: ragged lengths (padding + in-kernel tail mask) + bf16 MXU --
    bz3, lq3, lk3, d3 = 2, 200, 200, 64
    kq3, kk3, kv3 = jax.random.split(jax.random.PRNGKey(2), 3)
    q3 = jax.random.normal(kq3, (bz3, lq3, d3), dtype=jnp.float32)
    k3 = jax.random.normal(kk3, (bz3, lk3, d3), dtype=jnp.float32)
    v3 = jax.random.normal(kv3, (bz3, lk3, d3), dtype=jnp.float32)
    mask3 = jnp.zeros((bz3, lq3, lk3), dtype=jnp.bool_).at[0, :, -17:].set(True)
    ref3 = _reference(q3, k3, v3, mask3, 1.0 / d3 ** 0.5)

    out3 = jax.block_until_ready(
        self_attention(q3, k3, v3, mask3, block_q=128, block_k=128))
    assert out3.shape == (bz3, lq3, d3)
    assert jnp.allclose(out3, ref3, atol=1e-4, rtol=1e-4)

    out3b = jax.block_until_ready(
        self_attention(q3, k3, v3, mask3, block_q=128, block_k=128,
                       mxu_bf16=True))
    assert jnp.allclose(out3b, ref3, atol=2e-2, rtol=2e-2)

    print("KERNEL_OK")
</pallas_src>

<mosaic_0001>
module attributes {stable_mosaic.version = 11 : i64} {
  func.func @_flash_kernel(%arg0: i32, %arg1: i32, %arg2: i32, %arg3: memref<1x8x32xf32, #tpu.memory_space<vmem>>, %arg4: memref<1x8x32xf32, #tpu.memory_space<vmem>>, %arg5: memref<1x8x32xf32, #tpu.memory_space<vmem>>, %arg6: memref<1x8x8xi8, #tpu.memory_space<vmem>>, %arg7: memref<1x8x32xf32, #tpu.memory_space<vmem>>, %arg8: memref<8x32xf32, #tpu.memory_space<vmem>>, %arg9: memref<8x1xf32, #tpu.memory_space<vmem>>, %arg10: memref<8x1xf32, #tpu.memory_space<vmem>>, %arg11: memref<8x32xf32, #tpu.memory_space<vmem>>) attributes {dimension_semantics = [#tpu.dimension_semantics<parallel>, #tpu.dimension_semantics<parallel>, #tpu.dimension_semantics<arbitrary>], iteration_bounds = array<i64: 2, 1, 1>, scalar_prefetch = 0 : i64, scratch_operands = 4 : i64, tpu.core_type = #tpu.core_type<tc>, window_params = [{transform_indices = @transform_0, window_bounds = array<i64: 1, 8, 32>}, {transform_indices = @transform_1, window_bounds = array<i64: 1, 8, 32>}, {transform_indices = @transform_2, window_bounds = array<i64: 1, 8, 32>}, {transform_indices = @transform_3, window_bounds = array<i64: 1, 8, 8>}, {transform_indices = @transform_4, window_bounds = array<i64: 1, 8, 32>}]} {
    %c0_i32 = arith.constant 0 : i32
    %0 = arith.cmpi eq, %arg2, %c0_i32 : i32
    %1 = arith.extui %0 : i1 to i32
    %c0_i32_0 = arith.constant 0 : i32
    %2 = arith.cmpi ne, %1, %c0_i32_0 : i32
    scf.if %2 {
      %c0_29 = arith.constant 0 : index
      %c0_30 = arith.constant 0 : index
      %c0_31 = arith.constant 0 : index
      %40 = vector.load %arg3[%c0_29, %c0_30, %c0_31] : memref<1x8x32xf32, #tpu.memory_space<vmem>>, vector<1x8x32xf32>
      %41 = vector.shape_cast %40 : vector<1x8x32xf32> to vector<8x32xf32>
      %cst_32 = arith.constant 0.176776692 : f32
      %42 = vector.broadcast %cst_32 : f32 to vector<8x32xf32>
      %43 = arith.mulf %41, %42 : vector<8x32xf32>
      %c0_33 = arith.constant 0 : index
      %c0_34 = arith.constant 0 : index
      %44 = vector.load %arg8[%c0_33, %c0_34] : memref<8x32xf32, #tpu.memory_space<vmem>>, vector<8x32xf32>
      tpu.vector_store %arg8[%c0_33, %c0_34], %43 {strides = array<i32>} : memref<8x32xf32, #tpu.memory_space<vmem>>, vector<8x32xf32>,
      %cst_35 = arith.constant 0xFF800000 : f32
      %45 = vector.broadcast %cst_35 : f32 to vector<8x1xf32>
      %c0_36 = arith.constant 0 : index
      %c0_37 = arith.constant 0 : index
      %46 = vector.load %arg9[%c0_36, %c0_37] : memref<8x1xf32, #tpu.memory_space<vmem>>, vector<8x1xf32>
      tpu.vector_store %arg9[%c0_36, %c0_37], %45 {strides = array<i32>} : memref<8x1xf32, #tpu.memory_space<vmem>>, vector<8x1xf32>,
      %cst_38 = arith.constant 0.000000e+00 : f32
      %47 = vector.broadcast %cst_38 : f32 to vector<8x1xf32>
      %c0_39 = arith.constant 0 : index
      %c0_40 = arith.constant 0 : index
      %48 = vector.load %arg10[%c0_39, %c0_40] : memref<8x1xf32, #tpu.memory_space<vmem>>, vector<8x1xf32>
      tpu.vector_store %arg10[%c0_39, %c0_40], %47 {strides = array<i32>} : memref<8x1xf32, #tpu.memory_space<vmem>>, vector<8x1xf32>,
      %cst_41 = arith.constant 0.000000e+00 : f32
      %49 = vector.broadcast %cst_41 : f32 to vector<8x32xf32>
      %c0_42 = arith.constant 0 : index
      %c0_43 = arith.constant 0 : index
      %50 = vector.load %arg11[%c0_42, %c0_43] : memref<8x32xf32, #tpu.memory_space<vmem>>, vector<8x32xf32>
      tpu.vector_store %arg11[%c0_42, %c0_43], %49 {strides = array<i32>} : memref<8x32xf32, #tpu.memory_space<vmem>>, vector<8x32xf32>,
    } else {
    }
    %c0 = arith.constant 0 : index
    %c0_1 = arith.constant 0 : index
    %3 = vector.load %arg8[%c0, %c0_1] : memref<8x32xf32, #tpu.memory_space<vmem>>, vector<8x32xf32>
    %c0_2 = arith.constant 0 : index
    %c0_3 = arith.constant 0 : index
    %c0_4 = arith.constant 0 : index
    %4 = vector.load %arg4[%c0_2, %c0_3, %c0_4] : memref<1x8x32xf32, #tpu.memory_space<vmem>>, vector<1x8x32xf32>
    %5 = vector.shape_cast %4 : vector<1x8x32xf32> to vector<8x32xf32>
    %cst = arith.constant dense<0.000000e+00> : vector<8x8xf32>
    %6 = tpu.matmul %3, %5, %cst {dimension_numbers = #tpu.dot_dimension_numbers<[1], [1], [0], [0], [0, 0, 1, 0], [], []>} : vector<8x32xf32>, vector<8x32xf32>, vector<8x8xf32> -> vector<8x8xf32>
    %c0_5 = arith.constant 0 : index
    %c0_6 = arith.constant 0 : index
    %c0_7 = arith.constant 0 : index
    %7 = vector.load %arg6[%c0_5, %c0_6, %c0_7] : memref<1x8x8xi8, #tpu.memory_space<vmem>>, vector<1x8x8xi8>
    %8 = vector.shape_cast %7 : vector<1x8x8xi8> to vector<8x8xi8>
    %c0_i8 = arith.constant 0 : i8
    %9 = vector.broadcast %c0_i8 : i8 to vector<8x8xi8>
    %10 = arith.cmpi ne, %8, %9 : vector<8x8xi8>
    %cst_8 = arith.constant -1.000000e+09 : f32
    %11 = vector.broadcast %cst_8 : f32 to vector<8x8xf32>
    %12 = arith.select %10, %11, %6 : vector<8x8xi1>, vector<8x8xf32>
    %c0_9 = arith.constant 0 : index
    %c0_10 = arith.constant 0 : index
    %13 = vector.load %arg9[%c0_9, %c0_10] : memref<8x1xf32, #tpu.memory_space<vmem>>, vector<8x1xf32>
    %cst_11 = arith.constant dense<0xFF800000> : vector<8xf32>
    %14 = vector.multi_reduction <maximumf>, %12, %cst_11 [1] : vector<8x8xf32> to vector<8xf32>
    %15 = vector.shape_cast %14 : vector<8xf32> to vector<8x1xf32>
    %16 = arith.maximumf %13, %15 : vector<8x1xf32>
    %17 = arith.subf %13, %16 : vector<8x1xf32>
    %18 = math.exp %17 : vector<8x1xf32>
    %19 = vector.broadcast %16 : vector<8x1xf32> to vector<8x8xf32>
    %20 = arith.subf %12, %19 : vector<8x8xf32>
    %21 = math.exp %20 : vector<8x8xf32>
    %c0_12 = arith.constant 0 : index
    %c0_13 = arith.constant 0 : index
    %22 = vector.load %arg10[%c0_12, %c0_13] : memref<8x1xf32, #tpu.memory_space<vmem>>, vector<8x1xf32>
    %23 = arith.mulf %18, %22 : vector<8x1xf32>
    %cst_14 = arith.constant dense<0.000000e+00> : vector<8xf32>
    %24 = vector.multi_reduction <add>, %21, %cst_14 [1] : vector<8x8xf32> to vector<8xf32>
    %25 = vector.shape_cast %24 : vector<8xf32> to vector<8x1xf32>
    %26 = arith.addf %23, %25 : vector<8x1xf32>
    %c0_15 = arith.constant 0 : index
    %c0_16 = arith.constant 0 : index
    %27 = vector.load %arg10[%c0_15, %c0_16] : memref<8x1xf32, #tpu.memory_space<vmem>>, vector<8x1xf32>
    tpu.vector_store %arg10[%c0_15, %c0_16], %26 {strides = array<i32>} : memref<8x1xf32, #tpu.memory_space<vmem>>, vector<8x1xf32>,
    %c0_17 = arith.constant 0 : index
    %c0_18 = arith.constant 0 : index
    %28 = vector.load %arg11[%c0_17, %c0_18] : memref<8x32xf32, #tpu.memory_space<vmem>>, vector<8x32xf32>
    %29 = vector.broadcast %18 : vector<8x1xf32> to vector<8x32xf32>
    %30 = arith.mulf %29, %28 : vector<8x32xf32>
    %c0_19 = arith.constant 0 : index
    %c0_20 = arith.constant 0 : index
    %c0_21 = arith.constant 0 : index
    %31 = vector.load %arg5[%c0_19, %c0_20, %c0_21] : memref<1x8x32xf32, #tpu.memory_space<vmem>>, vector<1x8x32xf32>
    %32 = vector.shape_cast %31 : vector<1x8x32xf32> to vector<8x32xf32>
    %cst_22 = arith.constant dense<0.000000e+00> : vector<8x32xf32>
    %33 = tpu.matmul %21, %32, %cst_22 {dimension_numbers = #tpu.dot_dimension_numbers<[1], [0], [0], [1], [0, 0, 1, 1], [], []>} : vector<8x8xf32>, vector<8x32xf32>, vector<8x32xf32> -> vector<8x32xf32>
    %34 = arith.addf %30, %33 : vector<8x32xf32>
    %c0_23 = arith.constant 0 : index
    %c0_24 = arith.constant 0 : index
    %35 = vector.load %arg11[%c0_23, %c0_24] : memref<8x32xf32, #tpu.memory_space<vmem>>, vector<8x32xf32>
    tpu.vector_store %arg11[%c0_23, %c0_24], %34 {strides = array<i32>} : memref<8x32xf32, #tpu.memory_space<vmem>>, vector<8x32xf32>,
    %c0_25 = arith.constant 0 : index
    %c0_26 = arith.constant 0 : index
    %36 = vector.load %arg9[%c0_25, %c0_26] : memref<8x1xf32, #tpu.memory_space<vmem>>, vector<8x1xf32>
    tpu.vector_store %arg9[%c0_25, %c0_26], %16 {strides = array<i32>} : memref<8x1xf32, #tpu.memory_space<vmem>>, vector<8x1xf32>,
    %c0_i32_27 = arith.constant 0 : i32
    %37 = arith.cmpi eq, %arg2, %c0_i32_27 : i32
    %38 = arith.extui %37 : i1 to i32
    %c0_i32_28 = arith.constant 0 : i32
    %39 = arith.cmpi ne, %38, %c0_i32_28 : i32
    scf.if %39 {
      %c0_29 = arith.constant 0 : index
      %c0_30 = arith.constant 0 : index
      %40 = vector.load %arg10[%c0_29, %c0_30] : memref<8x1xf32, #tpu.memory_space<vmem>>, vector<8x1xf32>
      %cst_31 = arith.constant 1.000000e+00 : f32
      %41 = vector.broadcast %cst_31 : f32 to vector<8x1xf32>
      %42 = arith.divf %41, %40 : vector<8x1xf32>
      %c0_32 = arith.constant 0 : index
      %c0_33 = arith.constant 0 : index
      %43 = vector.load %arg11[%c0_32, %c0_33] : memref<8x32xf32, #tpu.memory_space<vmem>>, vector<8x32xf32>
      %44 = vector.broadcast %42 : vector<8x1xf32> to vector<8x32xf32>
      %45 = arith.mulf %43, %44 : vector<8x32xf32>
      %c0_34 = arith.constant 0 : index
      %c0_35 = arith.constant 0 : index
      %c0_36 = arith.constant 0 : index
      %46 = vector.load %arg7[%c0_34, %c0_35, %c0_36] : memref<1x8x32xf32, #tpu.memory_space<vmem>>, vector<1x8x32xf32>
      %47 = vector.shape_cast %46 : vector<1x8x32xf32> to vector<8x32xf32>
      %48 = vector.shape_cast %45 : vector<8x32xf32> to vector<1x8x32xf32>
      tpu.vector_store %arg7[%c0_34, %c0_35, %c0_36], %48 {strides = array<i32>} : memref<1x8x32xf32, #tpu.memory_space<vmem>>, vector<1x8x32xf32>,
    } else {
    }
    return
  }
  func.func @transform_0(%arg0: i32, %arg1: i32, %arg2: i32) -> (i32, i32, i32) {
    %c0_i32 = arith.constant 0 : i32
    %c0_i32_0 = arith.constant 0 : i32
    return %arg0, %arg1, %c0_i32 : i32, i32, i32
  }
  func.func @transform_1(%arg0: i32, %arg1: i32, %arg2: i32) -> (i32, i32, i32) {
    %c0_i32 = arith.constant 0 : i32
    %c0_i32_0 = arith.constant 0 : i32
    return %arg0, %arg2, %c0_i32 : i32, i32, i32
  }
  func.func @transform_2(%arg0: i32, %arg1: i32, %arg2: i32) -> (i32, i32, i32) {
    %c0_i32 = arith.constant 0 : i32
    %c0_i32_0 = arith.constant 0 : i32
    return %arg0, %arg2, %c0_i32 : i32, i32, i32
  }
  func.func @transform_3(%arg0: i32, %arg1: i32, %arg2: i32) -> (i32, i32, i32) {
    %c0_i32 = arith.constant 0 : i32
    return %arg0, %arg1, %arg2 : i32, i32, i32
  }
  func.func @transform_4(%arg0: i32, %arg1: i32, %arg2: i32) -> (i32, i32, i32) {
    %c0_i32 = arith.constant 0 : i32
    %c0_i32_0 = arith.constant 0 : i32
    return %arg0, %arg1, %c0_i32 : i32, i32, i32
  }
}

</mosaic_0001>

<llo_original>
// kernel: tpu_custom_call.1
$region0: #{tpu_custom_call.1}
  #allocation0 [shape = 'u32[]', space=smem, size = 0x4, offset = 0x4, fixed_abs, tag = 'smem constant byte address 0x4 - core index']
  #allocation1 [shape = 'u32[144,128]{1,0:T(1,128)}', space=vmem, size = 0x12000, scoped, tag = 'internal scratch']
  #allocation2 [shape = 'f32[8,32]{1,0:T(8,128)}', space=vmem, size = 0x1000, scoped, tag = 'scratch operand']
  #allocation3 [shape = 'f32[8,1]{1,0:T(8,128)}', space=vmem, size = 0x1000, scoped, tag = 'scratch operand']
  #allocation4 [shape = 'f32[8,1]{1,0:T(8,128)}', space=vmem, size = 0x1000, scoped, tag = 'scratch operand']
  #allocation5 [shape = 'f32[8,32]{1,0:T(8,128)}', space=vmem, size = 0x1000, scoped, tag = 'scratch operand']
  %s0 = inlined_call_operand.hbm [shape: f32[2,8,32], index: 0, kind: input, shape index: {}]
  %s1 = inlined_call_operand.hbm [shape: f32[2,8,32], index: 1, kind: input, shape index: {}]
  %s2 = inlined_call_operand.hbm [shape: f32[2,8,32], index: 2, kind: input, shape index: {}]
  %s3 = inlined_call_operand.vmem [shape: s8[2,8,8], index: 3, kind: input, shape index: {}]
  %s4 = inlined_call_operand.hbm [shape: f32[2,8,32], index: 4, kind: output, shape index: {}]
  %s5 = sld [smem:[#allocation0]]
  $region69: #{tpu_custom_call.1} parent=0
    _
  %s7 = ssub.s32 1, %s5
  %s8 = scalar_select 0, %s7, %s5
  $region1: #{tpu_custom_call.1} parent=0
    #allocation6 [shape = 'u8[8192]{0}', space=vmem, size = 0x2000, scoped, tag = 'input window, operand 0']
    #allocation7 [shape = 's32[2]{0}', space=sflag, size = 0x8, scoped, tag = 'scoped memory for tpu_custom_call.1']
    #allocation8 [shape = 's32[2]{0}', space=sflag, size = 0x8, scoped, tag = 'scoped memory for tpu_custom_call.1']
    #allocation9 [shape = 'u8[8192]{0}', space=vmem, size = 0x2000, scoped, tag = 'input window, operand 1']
    #allocation10 [shape = 's32[2]{0}', space=sflag, size = 0x8, scoped, tag = 'scoped memory for tpu_custom_call.1']
    #allocation11 [shape = 'u8[8192]{0}', space=vmem, size = 0x2000, scoped, tag = 'input window, operand 2']
    #allocation12 [shape = 'u8[8192]{0}', space=vmem, size = 0x2000, scoped, tag = 'output window, operand 0']
    %9 = vsyncpa [#allocation7], 0
    %s10 = scalar_lea.sflag [#allocation7], 1
    %11 = vsyncpa %s10, 0
    %12 = vsyncpa [#allocation10], 0
    %s13 = scalar_lea.sflag [#allocation10], 1
    %14 = vsyncpa %s13, 0
    %15 = vsyncpa [#allocation8], 0
    %s16 = scalar_lea.sflag [#allocation8], 1
    %17 = vsyncpa %s16, 0
    loop: start=0, step=1, limit=4
    $region2: #{tpu_custom_call.1} parent=1 // loop_pre_header
      _
    $region3: #{tpu_custom_call.1} parent=1 // loop_header
      %s19 = sphi 0, %s23
      %p20 = scmp.ge.s32.totalorder %s19, 4
      %s26 = sphi 0, %s45
      %s27 = sphi 0, %s41
      %s28 = sphi 0, %s37
      %s29 = sphi 0, %s26
      %s30 = sphi 0, %s27
      %s31 = sphi 0, %s28
      %s32 = sphi 0, %s29
      %s33 = sphi 0, %s30
      %s34 = sphi 0, %s31
      %s50 = sphi 0, %s52
      %s53 = sphi 0, %s50
      %s54 = sphi 0, %s53
      %s70 = sphi 0, %s54
      %s78 = sphi 0, %s80
      %s81 = sphi 0, %s78
      %s82 = sphi 0, %s81
      %s98 = sphi 0, %s82
      %s106 = sphi 0, %s108
      %s109 = sphi 0, %s106
      %s110 = sphi 0, %s109
      %s126 = sphi 0, %s110
      %s136 = sphi 0, %s138
      %s139 = sphi 0, %s136
      %s140 = sphi 0, %s139
      %s156 = sphi 0, %s140
      %s164 = sphi 0, %s166
      %s167 = sphi 0, %s164
      %s168 = sphi 0, %s167
      %s184 = sphi 0, %s168
    $region4: #{tpu_custom_call.1} parent=1 // loop_header_branch
      %22 = sbr.rel (%p20) target = $region8
    $region5: #{tpu_custom_call.1} parent=1 // loop_body
      %s24 = ssub.s32 %s19, 1
      %s25 = ssub.s32 %s19, 2
      %s35 = sadd.s32 1, %s28
      %p36 = scmp.ge.s32.totalorder %s35, 1
      %s37 = scalar_select %p36, 0, %s35
      %s38 = sadd.s32 1, %s27
      %s39 = scalar_select %p36, %s38, %s27
      %p40 = scmp.ge.s32.totalorder %s39, 1
      %s41 = scalar_select %p40, 0, %s39
      %s42 = sadd.s32 1, %s26
      %s43 = scalar_select %p40, %s42, %s26
      %p44 = scmp.ge.s32.totalorder %s43, 2
      %s45 = scalar_select %p44, 0, %s43
      %s46 = ssub.s32 %s26, %s45
      %s47 = ssub.s32 %s27, %s41
      %s48 = sor.u32 %s46, %s47
      %p49 = scmp.eq.s32.totalorder %s48, 0
      %s51 = sadd.s32 %s50, 1
      %s52 = scalar_select %p49, %s50, %s51
      %p55 = pneg %p49
      %p56 = scmp.eq.s32.totalorder %s19, 1
      %p57 = por %p55, %p56
      %p58 = scmp.ne.s32.totalorder %s50, %s53
      %p59 = scmp.eq.s32.totalorder %s19, 0
      %p60 = por %p58, %p59
      %p61 = scmp.ne.s32.totalorder %s50, %s53
      %p62 = scmp.eq.s32.totalorder %s24, 1
      %p63 = por %p61, %p62
      %p64 = scmp.ne.s32.totalorder %s53, %s54
      %p65 = scmp.eq.s32.totalorder %s24, 0
      %p66 = por %p64, %p65
      %p67 = scmp.ne.s32.totalorder %s53, %s54
      %p68 = scmp.eq.s32.totalorder %s25, 1
      %p69 = por %p67, %p68
      %p71 = scmp.ne.s32.totalorder %s54, %s70
      %p72 = scmp.eq.s32.totalorder %s25, 0
      %p73 = por %p71, %p72
      %s74 = ssub.s32 %s26, %s45
      %s75 = ssub.s32 %s28, %s37
      %s76 = sor.u32 %s74, %s75
      %p77 = scmp.eq.s32.totalorder %s76, 0
      %s79 = sadd.s32 %s78, 1
      %s80 = scalar_select %p77, %s78, %s79
      %p83 = pneg %p77
      %p84 = scmp.eq.s32.totalorder %s19, 1
      %p85 = por %p83, %p84
      %p86 = scmp.ne.s32.totalorder %s78, %s81
      %p87 = scmp.eq.s32.totalorder %s19, 0
      %p88 = por %p86, %p87
      %p89 = scmp.ne.s32.totalorder %s78, %s81
      %p90 = scmp.eq.s32.totalorder %s24, 1
      %p91 = por %p89, %p90
      %p92 = scmp.ne.s32.totalorder %s81, %s82
      %p93 = scmp.eq.s32.totalorder %s24, 0
      %p94 = por %p92, %p93
      %p95 = scmp.ne.s32.totalorder %s81, %s82
      %p96 = scmp.eq.s32.totalorder %s25, 1
      %p97 = por %p95, %p96
      %p99 = scmp.ne.s32.totalorder %s82, %s98
      %p100 = scmp.eq.s32.totalorder %s25, 0
      %p101 = por %p99, %p100
      %s102 = ssub.s32 %s26, %s45
      %s103 = ssub.s32 %s28, %s37
      %s104 = sor.u32 %s102, %s103
      %p105 = scmp.eq.s32.totalorder %s104, 0
      %s107 = sadd.s32 %s106, 1
      %s108 = scalar_select %p105, %s106, %s107
      %p111 = pneg %p105
      %p112 = scmp.eq.s32.totalorder %s19, 1
      %p113 = por %p111, %p112
      %p114 = scmp.ne.s32.totalorder %s106, %s109
      %p115 = scmp.eq.s32.totalorder %s19, 0
      %p116 = por %p114, %p115
      %p117 = scmp.ne.s32.totalorder %s106, %s109
      %p118 = scmp.eq.s32.totalorder %s24, 1
      %p119 = por %p117, %p118
      %p120 = scmp.ne.s32.totalorder %s109, %s110
      %p121 = scmp.eq.s32.totalorder %s24, 0
      %p122 = por %p120, %p121
      %p123 = scmp.ne.s32.totalorder %s109, %s110
      %p124 = scmp.eq.s32.totalorder %s25, 1
      %p125 = por %p123, %p124
      %p127 = scmp.ne.s32.totalorder %s110, %s126
      %p128 = scmp.eq.s32.totalorder %s25, 0
      %p129 = por %p127, %p128
      %s130 = ssub.s32 %s26, %s45
      %s131 = ssub.s32 %s27, %s41
      %s132 = sor.u32 %s130, %s131
      %s133 = ssub.s32 %s28, %s37
      %s134 = sor.u32 %s132, %s133
      %p135 = scmp.eq.s32.totalorder %s134, 0
      %s137 = sadd.s32 %s136, 1
      %s138 = scalar_select %p135, %s136, %s137
      %p141 = pneg %p135
      %p142 = scmp.eq.s32.totalorder %s19, 1
      %p143 = por %p141, %p142
      %p144 = scmp.ne.s32.totalorder %s136, %s139
      %p145 = scmp.eq.s32.totalorder %s19, 0
      %p146 = por %p144, %p145
      %p147 = scmp.ne.s32.totalorder %s136, %s139
      %p148 = scmp.eq.s32.totalorder %s24, 1
      %p149 = por %p147, %p148
      %p150 = scmp.ne.s32.totalorder %s139, %s140
      %p151 = scmp.eq.s32.totalorder %s24, 0
      %p152 = por %p150, %p151
      %p153 = scmp.ne.s32.totalorder %s139, %s140
      %p154 = scmp.eq.s32.totalorder %s25, 1
      %p155 = por %p153, %p154
      %p157 = scmp.ne.s32.totalorder %s140, %s156
      %p158 = scmp.eq.s32.totalorder %s25, 0
      %p159 = por %p157, %p158
      %s160 = ssub.s32 %s26, %s45
      %s161 = ssub.s32 %s27, %s41
      %s162 = sor.u32 %s160, %s161
      %p163 = scmp.eq.s32.totalorder %s162, 0
      %s165 = sadd.s32 %s164, 1
      %s166 = scalar_select %p163, %s164, %s165
      %p169 = pneg %p163
      %p170 = scmp.eq.s32.totalorder %s19, 1
      %p171 = por %p169, %p170
      %p172 = scmp.ne.s32.totalorder %s164, %s167
      %p173 = scmp.eq.s32.totalorder %s19, 0
      %p174 = por %p172, %p173
      %p175 = scmp.ne.s32.totalorder %s164, %s167
      %p176 = scmp.eq.s32.totalorder %s24, 1
      %p177 = por %p175, %p176
      %p178 = scmp.ne.s32.totalorder %s167, %s168
      %p179 = scmp.eq.s32.totalorder %s24, 0
      %p180 = por %p178, %p179
      %p181 = scmp.ne.s32.totalorder %s167, %s168
      %p182 = scmp.eq.s32.totalorder %s25, 1
      %p183 = por %p181, %p182
      %p185 = scmp.ne.s32.totalorder %s168, %s184
      %p186 = scmp.eq.s32.totalorder %s25, 0
      %p187 = por %p185, %p186
      %p188 = scmp.le.s32.totalorder 1, %s19
      %p189 = scmp.lt.s32.totalorder %s19, 3
      %p190 = pnand %p188, %p189
      %p191 = pneg %p190
      // Predicated region
      $region9: #{tpu_custom_call.1} parent=5 // pred_check
        _
      $region10: #{tpu_custom_call.1} parent=5 // pred_check_branch
        %193 = sbr.rel (%p190) target = $region12
      $region11: #{tpu_custom_call.1} parent=5 // pred_region
        %s194 = ssub.s32 %s19, 1
      $region12: #{tpu_custom_call.1} parent=5 // pred_fallthru
        _
      %p195 = scmp.lt.s32.totalorder %s19, 2
      // Predicated region
      $region13: #{tpu_custom_call.1} parent=5 // pred_check
        %p196 = pneg %p195
      $region14: #{tpu_custom_call.1} parent=5 // pred_check_branch
        %198 = sbr.rel (%p196) target = $region16
      $region15: #{tpu_custom_call.1} parent=5 // pred_region
        // Predicated region
        $region17: #{tpu_custom_call.1} parent=15 // pred_check
          %p199 = pneg %p60
        $region18: #{tpu_custom_call.1} parent=15 // pred_check_branch
          %201 = sbr.rel (%p199) target = $region20
        $region19: #{tpu_custom_call.1} parent=15 // pred_region
          %s202 = sand.u32 %s50, 1
          %s203 = scalar_lea.sflag [#allocation7], %s202
          %s204 = sand.u32 %s50, 1
          %s205 = smul.addr %s204, 8
          %s206 = scalar_lea.vmem [#allocation6], %s205
          %s208 = ssub.s32 128, 128
          %209 = vsyncadd %s203, %s208
          %s210 = sadd.s32 %s27, %s26
          %s211 = smul.addr %s210, 128
          %s212 = scalar_lea.hbm %s0, %s211
          %s214 = sshll.u32 %s206, 4
          %s215 = int_to_ptr.vmem [resolvable:$true] %s214
          %217 = dma.hbm_to_vmem [thread:$0]  %s212, 128, %s215, %s203
        $region20: #{tpu_custom_call.1} parent=15 // pred_fallthru
          _
        // Predicated region
        $region21: #{tpu_custom_call.1} parent=15 // pred_check
          %p218 = pneg %p88
        $region22: #{tpu_custom_call.1} parent=15 // pred_check_branch
          %220 = sbr.rel (%p218) target = $region24
        $region23: #{tpu_custom_call.1} parent=15 // pred_region
          %s221 = sand.u32 %s19, 1
          %s222 = scalar_lea.sflag [#allocation10], %s221
          %s223 = sand.u32 %s78, 1
          %s224 = smul.addr %s223, 8
          %s225 = scalar_lea.vmem [#allocation9], %s224
          %s227 = ssub.s32 128, 128
          %228 = vsyncadd %s222, %s227
          %s229 = sadd.s32 %s28, %s26
          %s230 = smul.addr %s229, 128
          %s231 = scalar_lea.hbm %s1, %s230
          %s233 = sshll.u32 %s225, 4
          %s234 = int_to_ptr.vmem [resolvable:$true] %s233
          %236 = dma.hbm_to_vmem [thread:$0]  %s231, 128, %s234, %s222
        $region24: #{tpu_custom_call.1} parent=15 // pred_fallthru
          _
        // Predicated region
        $region25: #{tpu_custom_call.1} parent=15 // pred_check
          %p237 = pneg %p116
        $region26: #{tpu_custom_call.1} parent=15 // pred_check_branch
          %239 = sbr.rel (%p237) target = $region28
        $region27: #{tpu_custom_call.1} parent=15 // pred_region
          %s240 = sand.u32 %s19, 1
          %s241 = scalar_lea.sflag [#allocation10], %s240
          %s242 = sand.u32 %s106, 1
          %s243 = smul.addr %s242, 8
          %s244 = scalar_lea.vmem [#allocation11], %s243
          %s246 = ssub.s32 128, 128
          %247 = vsyncadd %s241, %s246
          %s248 = sadd.s32 %s28, %s26
          %s249 = smul.addr %s248, 128
          %s250 = scalar_lea.hbm %s2, %s249
          %s252 = sshll.u32 %s244, 4
          %s253 = int_to_ptr.vmem [resolvable:$true] %s252
          %255 = dma.hbm_to_vmem [thread:$0]  %s250, 128, %s253, %s241
        $region28: #{tpu_custom_call.1} parent=15 // pred_fallthru
          _
        // Predicated region
        $region29: #{tpu_custom_call.1} parent=15 // pred_check
          %p256 = pneg %p146
        $region30: #{tpu_custom_call.1} parent=15 // pred_check_branch
          %258 = sbr.rel (%p256) target = $region32
        $region31: #{tpu_custom_call.1} parent=15 // pred_region
          %p259 = scmp.lt.s32.totalorder %s26, 1
          %s260 = scalar_select %p259, %s26, 1
          %p261 = scmp.lt.s32.totalorder %s27, 0
          %s262 = scalar_select %p261, %s27, 0
          %p263 = scmp.lt.s32.totalorder %s28, 0
          %s264 = scalar_select %p263, %s28, 0
          %s265 = sadd.s32 %s264, %s262
          %s266 = sadd.s32 %s265, %s260
          %s267 = smul.addr %s266, 2
          %s268 = scalar_lea.vmem %s3, %s267
        $region32: #{tpu_custom_call.1} parent=15 // pred_fallthru
          _
      $region16: #{tpu_custom_call.1} parent=5 // pred_fallthru
        _
      %p269 = scmp.le.s32.totalorder 1, %s19
      %p270 = scmp.lt.s32.totalorder %s19, 3
      %p271 = pnand %p269, %p270
      %p272 = pneg %p271
      // Predicated region
      $region33: #{tpu_custom_call.1} parent=5 // pred_check
        _
      $region34: #{tpu_custom_call.1} parent=5 // pred_check_branch
        %274 = sbr.rel (%p271) target = $region36
      $region35: #{tpu_custom_call.1} parent=5 // pred_region
        %s275 = ssub.s32 %s19, 1
        %s276 = sand.u32 %s53, 1
        %s277 = scalar_lea.sflag [#allocation7], %s276
        %s278 = sand.u32 %s53, 1
        %s279 = smul.addr %s278, 8
        %s280 = scalar_lea.vmem [#allocation6], %s279
        // Predicated region
        $region37: #{tpu_custom_call.1} parent=35 // pred_check
          %p281 = pneg %p66
        $region38: #{tpu_custom_call.1} parent=35 // pred_check_branch
          %283 = sbr.rel (%p281) target = $region40
        $region39: #{tpu_custom_call.1} parent=35 // pred_region
          %284 = dma.done %s277, 128
        $region40: #{tpu_custom_call.1} parent=35 // pred_fallthru
          _
        %s285 = sand.u32 %s24, 1
        %s286 = scalar_lea.sflag [#allocation10], %s285
        %s287 = sand.u32 %s81, 1
        %s288 = smul.addr %s287, 8
        %s289 = scalar_lea.vmem [#allocation9], %s288
        // Predicated region
        $region41: #{tpu_custom_call.1} parent=35 // pred_check
          %p290 = pneg %p94
        $region42: #{tpu_custom_call.1} parent=35 // pred_check_branch
          %292 = sbr.rel (%p290) target = $region44
        $region43: #{tpu_custom_call.1} parent=35 // pred_region
          %293 = dma.done %s286, 128
        $region44: #{tpu_custom_call.1} parent=35 // pred_fallthru
          _
        %s294 = sand.u32 %s24, 1
        %s295 = scalar_lea.sflag [#allocation10], %s294
        %s296 = sand.u32 %s109, 1
        %s297 = smul.addr %s296, 8
        %s298 = scalar_lea.vmem [#allocation11], %s297
        // Predicated region
        $region45: #{tpu_custom_call.1} parent=35 // pred_check
          %p299 = pneg %p122
        $region46: #{tpu_custom_call.1} parent=35 // pred_check_branch
          %301 = sbr.rel (%p299) target = $region48
        $region47: #{tpu_custom_call.1} parent=35 // pred_region
          %302 = dma.done %s295, 128
        $region48: #{tpu_custom_call.1} parent=35 // pred_fallthru
          _
        %s303 = sand.u32 %s53, 1
        %s304 = scalar_lea.sflag [#allocation7], %s303
        %s305 = sand.u32 %s53, 1
        %s306 = smul.addr %s305, 8
        %s307 = scalar_lea.vmem [#allocation6], %s306
        %p308 = pneg %p66
        %p309 = pneg %p63
        %s310 = sand.u32 %s24, 1
        %s311 = scalar_lea.sflag [#allocation10], %s310
        %s312 = sand.u32 %s81, 1
        %s313 = smul.addr %s312, 8
        %s314 = scalar_lea.vmem [#allocation9], %s313
        %p315 = pneg %p94
        %p316 = pneg %p91
        %s317 = sand.u32 %s24, 1
        %s318 = scalar_lea.sflag [#allocation10], %s317
        %s319 = sand.u32 %s109, 1
        %s320 = smul.addr %s319, 8
        %s321 = scalar_lea.vmem [#allocation11], %s320
        %p322 = pneg %p122
        %p323 = pneg %p119
        %p324 = scmp.lt.s32.totalorder %s29, 1
        %s325 = scalar_select %p324, %s29, 1
        %p326 = scmp.lt.s32.totalorder %s30, 0
        %s327 = scalar_select %p326, %s30, 0
        %p328 = scmp.lt.s32.totalorder %s31, 0
        %s329 = scalar_select %p328, %s31, 0
        %s330 = sadd.s32 %s329, %s327
        %s331 = sadd.s32 %s330, %s325
        %s332 = smul.addr %s331, 2
        %s333 = scalar_lea.vmem %s3, %s332
        %p334 = pneg %p152
        %p335 = pneg %p149
        %p336 = pneg %p180
        %p337 = pneg %p177
        %s338 = sand.u32 %s167, 1
        %s339 = scalar_lea.sflag [#allocation8], %s338
        %s340 = sand.u32 %s167, 1
        %s341 = smul.addr %s340, 8
        %s342 = scalar_lea.vmem [#allocation12], %s341
        %p343 = scmp.lt.s32.totalorder %s29, 1
        %s344 = scalar_select %p343, %s29, 1
        %p345 = scmp.lt.s32.totalorder %s30, 0
        %s346 = scalar_select %p345, %s30, 0
        %p347 = scmp.lt.s32.totalorder %s31, 0
        %s348 = scalar_select %p347, %s31, 0
        %s349 = sadd.s32 %s348, %s346
        %s350 = sadd.s32 %s349, %s344
        %s351 = smul.addr %s350, 2
        %s352 = scalar_lea.vmem %s3, %s351
        %p355 = scmp.eq.s32.totalorder %s31, 0
        // Predicated region
        $region49: #{tpu_custom_call.1} parent=35 // pred_check
          %p356 = pneg %p355
        $region50: #{tpu_custom_call.1} parent=35 // pred_check_branch
          %358 = sbr.rel (%p356) target = $region52
        $region51: #{tpu_custom_call.1} parent=35 // pred_region
          %v359 = vld [vmem:[%s280] sm:$0xff]
          %v360 = vmul.f32 %v359, 0.17677669
          %vm361 = vcmask 261120
          %362 = vst.msk [vmem:[#allocation2] sm:$0xff] %vm361, %v360
          %vm363 = vcmask 7168
          %364 = vst.msk [vmem:[#allocation3] sm:$0xff] %vm363, -inf
          %365 = vst.msk [vmem:[#allocation4] sm:$0xff] %vm363, 0.0
          %366 = vst.msk [vmem:[#allocation5] sm:$0xff] %vm361, 0.0
        $region52: #{tpu_custom_call.1} parent=35 // pred_fallthru
          _
        %v367 = vld [vmem:[#allocation2] sm:$0xff]
        %v368 = vld [vmem:[%s289] sm:$0xff]
        %vm369 = vcmask 261120
        %v371 = vsel %vm369, %v367, 0
        %v374 = vsel %vm369, %v368, 0
        %376 = vmatprep.subr.mxu0 0.0
        %377 = vmatpush1.xpose.msra.mxu0 %v374
        %378 = vmatprep.subr.mxu0 0.0
        %379 = vmatpush1.xpose.msra.mxu0 0.0
        %380 = vmatprep.subr.mxu0 0.0
        %381 = vmatpush1.xpose.msra.mxu0 0.0
        %382 = vmatprep.subr.mxu0 0.0
        %383 = vmatpush1.xpose.msra.mxu0 0.0
        %384 = vmatprep.subr.mxu0 0.0
        %385 = vmatpush1.xpose.msra.mxu0 0.0
        %386 = vmatprep.subr.mxu0 0.0
        %387 = vmatpush1.xpose.msra.mxu0 0.0
        %388 = vmatprep.subr.mxu0 0.0
        %389 = vmatpush1.xpose.msra.mxu0 0.0
        %390 = vmatprep.subr.mxu0 0.0
        %391 = vmatpush1.xpose.msra.mxu0 0.0
        %392 = vmatprep.subr.mxu0 0.0
        %393 = vmatpush1.xpose.msra.mxu0 0.0
        %394 = vmatprep.subr.mxu0 0.0
        %395 = vmatpush1.xpose.msra.mxu0 0.0
        %396 = vmatprep.subr.mxu0 0.0
        %397 = vmatpush1.xpose.msra.mxu0 0.0
        %398 = vmatprep.subr.mxu0 0.0
        %399 = vmatpush1.xpose.msra.mxu0 0.0
        %400 = vmatprep.subr.mxu0 0.0
        %401 = vmatpush1.xpose.msra.mxu0 0.0
        %402 = vmatprep.subr.mxu0 0.0
        %403 = vmatpush1.xpose.msra.mxu0 0.0
        %404 = vmatprep.subr.mxu0 0.0
        %405 = vmatpush1.xpose.msra.mxu0 0.0
        %406 = vmatprep.subr.mxu0 0.0
        %407 = vmatpush1.xpose.msra.mxu0 0.0
        %408 = vmatprep.subr.mxu0 0.0
        %409 = vmatpush1.xpose.msra.mxu0 0.0
        %410 = vmatprep.subr.mxu0 0.0
        %411 = vmatpush1.xpose.msra.mxu0 0.0
        %412 = vmatprep.subr.mxu0 0.0
        %413 = vmatpush1.xpose.msra.mxu0 0.0
        %414 = vmatprep.subr.mxu0 0.0
        %415 = vmatpush1.xpose.msra.mxu0 0.0
        %416 = vmatprep.subr.mxu0 0.0
        %417 = vmatpush1.xpose.msra.mxu0 0.0
        %418 = vmatprep.subr.mxu0 0.0
        %419 = vmatpush1.xpose.msra.mxu0 0.0
        %420 = vmatprep.subr.mxu0 0.0
        %421 = vmatpush1.xpose.msra.mxu0 0.0
        %422 = vmatprep.subr.mxu0 0.0
        %423 = vmatpush1.xpose.msra.mxu0 0.0
        %424 = vmatprep.subr.mxu0 0.0
        %425 = vmatpush1.xpose.msra.mxu0 0.0
        %426 = vmatprep.subr.mxu0 0.0
        %427 = vmatpush1.xpose.msra.mxu0 0.0
        %428 = vmatprep.subr.mxu0 0.0
        %429 = vmatpush1.xpose.msra.mxu0 0.0
        %430 = vmatprep.subr.mxu0 0.0
        %431 = vmatpush1.xpose.msra.mxu0 0.0
        %432 = vmatprep.subr.mxu0 0.0
        %433 = vmatpush1.xpose.msra.mxu0 0.0
        %434 = vmatprep.subr.mxu0 0.0
        %435 = vmatpush1.xpose.msra.mxu0 0.0
        %436 = vmatprep.subr.mxu0 0.0
        %437 = vmatpush1.xpose.msra.mxu0 0.0
        %438 = vmatprep.subr.mxu0 0.0
        %439 = vmatpush1.xpose.msra.mxu0 0.0
        %440 = vmatprep.mubr.f32.mxu0 0.0
        %441 = vmatmul.mubr.f32.gmra.mrb[0].mxu0 %v371
        %v442 = vpop.f32.mrb[0].mxu0
        %v443 = vadd.f32 0.0, %v442
        %v444 = vpop.f32.mrb[0].mxu0
        %445 = vdwg.mxu0
        %v446 = vld [vmem:[%s352] sm:$0x3]
        %vm447 = vnez %v446
        %v448 = vsel %vm447, 16843009, 0
        %v449 = vunpack.c.0.s8 %v448
        %vm450 = vcmp.ne.s32.totalorder %v449, 0
        %v451 = vsel %vm450, -1e+09, %v443
        %v452 = vld [vmem:[#allocation3] sm:$0xff]
        %vm453 = vcmask 64512
        %v454 = vsel %vm453, %v451, -inf
        %455 = vmax.xlane.f32.xlu0 %v454
        %v456 = vpop.xlane.xlu0 %455
        %v457 = vmax.f32 %v452, %v456
        %v458 = vsub.f32 %v452, %v457
        %v459 = vmul.f32 %v458, 1.442695
        %v460 = vpow.pop %v459
        %462 = vset.pattern.permute.xlu0 0
        %463 = vperm.xlu0 %462, %v457
        %v464 = vpop.permute.xlu0 %463
        %v466 = vsub.f32 %v451, %v464
        %v467 = vmul.f32 %v466, 1.442695
        %v468 = vpow.pop %v467
        %v469 = vld [vmem:[#allocation4] sm:$0xff]
        %v470 = vmul.f32 %v460, %v469
        %v471 = vsel %vm453, %v468, 0.0
        %472 = vadd.xlane.f32.xlu0 %v471
        %v473 = vpop.xlane.xlu0 %472
        %v474 = vadd.f32 %v470, %v473
        %vm475 = vcmask 7168
        %476 = vst.msk [vmem:[#allocation4] sm:$0xff] %vm475, %v474
        %v477 = vld [vmem:[#allocation5] sm:$0xff]
        %479 = vset.pattern.permute.xlu0 0
        %480 = vperm.xlu0 %479, %v460
        %v481 = vpop.permute.xlu0 %480
        %v483 = vmul.f32 %v481, %v477
        %v484 = vld [vmem:[%s298] sm:$0xff]
        %v486 = vsel %vm453, %v468, 0
        %488 = vmatprep.subr.mxu0 0.0
        %489 = vmatpush1.msra.mxu0 %v484
        %490 = vmatprep.subr.mxu0 0.0
        %491 = vmatpush1.msra.mxu0 0.0
        %492 = vmatprep.subr.mxu0 0.0
        %493 = vmatpush1.msra.mxu0 0.0
        %494 = vmatprep.subr.mxu0 0.0
        %495 = vmatpush1.msra.mxu0 0.0
        %496 = vmatprep.subr.mxu0 0.0
        %497 = vmatpush1.msra.mxu0 0.0
        %498 = vmatprep.subr.mxu0 0.0
        %499 = vmatpush1.msra.mxu0 0.0
        %500 = vmatprep.subr.mxu0 0.0
        %501 = vmatpush1.msra.mxu0 0.0
        %502 = vmatprep.subr.mxu0 0.0
        %503 = vmatpush1.msra.mxu0 0.0
        %504 = vmatprep.subr.mxu0 0.0
        %505 = vmatpush1.msra.mxu0 0.0
        %506 = vmatprep.subr.mxu0 0.0
        %507 = vmatpush1.msra.mxu0 0.0
        %508 = vmatprep.subr.mxu0 0.0
        %509 = vmatpush1.msra.mxu0 0.0
        %510 = vmatprep.subr.mxu0 0.0
        %511 = vmatpush1.msra.mxu0 0.0
        %512 = vmatprep.subr.mxu0 0.0
        %513 = vmatpush1.msra.mxu0 0.0
        %514 = vmatprep.subr.mxu0 0.0
        %515 = vmatpush1.msra.mxu0 0.0
        %516 = vmatprep.subr.mxu0 0.0
        %517 = vmatpush1.msra.mxu0 0.0
        %518 = vmatprep.subr.mxu0 0.0
        %519 = vmatpush1.msra.mxu0 0.0
        %520 = vmatprep.subr.mxu0 0.0
        %521 = vmatpush1.msra.mxu0 0.0
        %522 = vmatprep.subr.mxu0 0.0
        %523 = vmatpush1.msra.mxu0 0.0
        %524 = vmatprep.subr.mxu0 0.0
        %525 = vmatpush1.msra.mxu0 0.0
        %526 = vmatprep.subr.mxu0 0.0
        %527 = vmatpush1.msra.mxu0 0.0
        %528 = vmatprep.subr.mxu0 0.0
        %529 = vmatpush1.msra.mxu0 0.0
        %530 = vmatprep.subr.mxu0 0.0
        %531 = vmatpush1.msra.mxu0 0.0
        %532 = vmatprep.subr.mxu0 0.0
        %533 = vmatpush1.msra.mxu0 0.0
        %534 = vmatprep.subr.mxu0 0.0
        %535 = vmatpush1.msra.mxu0 0.0
        %536 = vmatprep.subr.mxu0 0.0
        %537 = vmatpush1.msra.mxu0 0.0
        %538 = vmatprep.subr.mxu0 0.0
        %539 = vmatpush1.msra.mxu0 0.0
        %540 = vmatprep.subr.mxu0 0.0
        %541 = vmatpush1.msra.mxu0 0.0
        %542 = vmatprep.subr.mxu0 0.0
        %543 = vmatpush1.msra.mxu0 0.0
        %544 = vmatprep.subr.mxu0 0.0
        %545 = vmatpush1.msra.mxu0 0.0
        %546 = vmatprep.subr.mxu0 0.0
        %547 = vmatpush1.msra.mxu0 0.0
        %548 = vmatprep.subr.mxu0 0.0
        %549 = vmatpush1.msra.mxu0 0.0
        %550 = vmatprep.subr.mxu0 0.0
        %551 = vmatpush1.msra.mxu0 0.0
        %552 = vmatprep.mubr.f32.mxu0 0.0
        %553 = vmatmul.mubr.f32.gmra.mrb[0].mxu0 %v486
        %v554 = vpop.f32.mrb[0].mxu0
        %v555 = vadd.f32 0.0, %v554
        %v556 = vpop.f32.mrb[0].mxu0
        %557 = vdwg.mxu0
        %v558 = vadd.f32 %v483, %v555
        %559 = vst.msk [vmem:[#allocation5] sm:$0xff] %vm369, %v558
        %560 = vst.msk [vmem:[#allocation3] sm:$0xff] %vm475, %v457
        // Predicated region
        $region53: #{tpu_custom_call.1} parent=35 // pred_check
          %p561 = pneg %p355
        $region54: #{tpu_custom_call.1} parent=35 // pred_check_branch
          %563 = sbr.rel (%p561) target = $region56
        $region55: #{tpu_custom_call.1} parent=35 // pred_region
          %v564 = vld [vmem:[#allocation4] sm:$0xff]
          %v565 = vrcp.pop %v564
          %v566 = vmul.f32 1.0, %v565
          %v567 = vld [vmem:[#allocation5] sm:$0xff]
          %569 = vset.pattern.permute.xlu0 0
          %570 = vperm.xlu0 %569, %v566
          %v571 = vpop.permute.xlu0 %570
          %v573 = vmul.f32 %v567, %v571
          %574 = vst.msk [vmem:[%s342] sm:$0xff] %vm369, %v573
        $region56: #{tpu_custom_call.1} parent=35 // pred_fallthru
          _
        %s575 = sand.u32 %s167, 1
        %s576 = scalar_lea.sflag [#allocation8], %s575
        %s577 = sand.u32 %s167, 1
        %s578 = smul.addr %s577, 8
        %s579 = scalar_lea.vmem [#allocation12], %s578
        // Predicated region
        $region57: #{tpu_custom_call.1} parent=35 // pred_check
          %p580 = pneg %p177
        $region58: #{tpu_custom_call.1} parent=35 // pred_check_branch
          %582 = sbr.rel (%p580) target = $region60
        $region59: #{tpu_custom_call.1} parent=35 // pred_region
          %s584 = ssub.s32 128, 128
          %585 = vsyncadd %s576, %s584
          %s586 = sadd.s32 %s30, %s29
          %s587 = smul.addr %s586, 128
          %s588 = scalar_lea.hbm %s4, %s587
          %s590 = sshll.u32 %s579, 4
          %s591 = int_to_ptr.vmem [resolvable:$true] %s590
          %593 = dma.vmem_to_hbm [thread:$0]  %s591, 128, %s588, %s576
        $region60: #{tpu_custom_call.1} parent=35 // pred_fallthru
          _
      $region36: #{tpu_custom_call.1} parent=5 // pred_fallthru
        _
      %p594 = scmp.le.s32.totalorder 2, %s19
      // Predicated region
      $region61: #{tpu_custom_call.1} parent=5 // pred_check
        %p595 = pneg %p594
      $region62: #{tpu_custom_call.1} parent=5 // pred_check_branch
        %597 = sbr.rel (%p595) target = $region64
      $region63: #{tpu_custom_call.1} parent=5 // pred_region
        %s598 = ssub.s32 %s19, 2
        // Predicated region
        $region65: #{tpu_custom_call.1} parent=63 // pred_check
          %p599 = pneg %p183
        $region66: #{tpu_custom_call.1} parent=63 // pred_check_branch
          %601 = sbr.rel (%p599) target = $region68
        $region67: #{tpu_custom_call.1} parent=63 // pred_region
          %s602 = sand.u32 %s168, 1
          %s603 = scalar_lea.sflag [#allocation8], %s602
          %s604 = sand.u32 %s168, 1
          %s605 = smul.addr %s604, 8
          %s606 = scalar_lea.vmem [#allocation12], %s605
          %607 = dma.done %s603, 128
        $region68: #{tpu_custom_call.1} parent=63 // pred_fallthru
          _
      $region64: #{tpu_custom_call.1} parent=5 // pred_fallthru
        _
    $region6: #{tpu_custom_call.1} parent=1 // loop_footer
      %s23 = sadd.s32 1, %s19
    $region7: #{tpu_custom_call.1} parent=1 // loop_footer_branch
      %18 = sbr.rel target = $region3
    $region8: #{tpu_custom_call.1} parent=1 // loop_exit
      _
    %608 = vsyncpa [#allocation7], 1
    %s609 = scalar_lea.sflag [#allocation7], 1
    %610 = vsyncpa %s609, 1
    %611 = vsyncpa [#allocation10], 1
    %s612 = scalar_lea.sflag [#allocation10], 1
    %613 = vsyncpa %s612, 1
    %614 = vsyncpa [#allocation8], 1
    %s615 = scalar_lea.sflag [#allocation8], 1
    %616 = vsyncpa %s615, 1

</llo_original>
